<compile_context>
chip_gen: v7x
topology: tpu7x:2x2x1
jax: 0.10.0
libtpu: 0.0.40
codegen_flags: <defaults>
</compile_context>

<pallas_src>
import functools

import jax
import jax.numpy as jnp
from jax.experimental import pallas as pl
from jax.experimental.pallas import tpu as pltpu

HIDDEN = 768    # BERT pooled output size (fc1 = Linear(768, 32))
FC1_OUT = 32
FC2_OUT = 1
_W2_PAD = 8     # pad fc2 weight rows to a full sublane group for the MXU


def _round_up(x, m):
    return (x + m - 1) // m * m


def finetune_head_kernel(x_ref, w1_ref, b1_ref, w2_ref, b2_ref, o_ref):
    # x : (TB, 768) native dtype  | w1: (768, 32) bf16 | b1: (1, 32) f32
    # w2: (8, 32) f32 (row 0 is the real fc2 weight, rows 1..7 are zero)
    # b2: (1, 1) f32              | o : (1, TB) f32  (lane-dense; batch on lanes)

    # In-kernel bf16 cast (free under the DMA; no extra HBM pass in the wrapper).
    x = x_ref[...].astype(jnp.bfloat16)

    # fc1 on the MXU, f32 accumulation.
    h = jnp.dot(x, w1_ref[...], preferred_element_type=jnp.float32)
    h = jnp.maximum(h + b1_ref[...], 0.0)               # ReLU -> (TB, 32) f32
    # Dropout(0.2): eval-mode identity (inference), no-op.

    # fc2 as an NT matmul: (8, 32) . (TB, 32)^T -> (8, TB). Row 0 is the real
    # output and arrives already lane-dense (batch on lanes), avoiding the
    # degenerate N=1 matmul and a masked (TB, 1) column store.
    z8 = jax.lax.dot_general(
        w2_ref[...], h,
        dimension_numbers=(((1,), (1,)), ((), ())),
        preferred_element_type=jnp.float32,
    )
    z = z8[0:1, :] + b2_ref[...]                         # (1, TB) f32

    # Exact sigmoid: exp on the EUP; one f32 divide on a (1, TB) row is
    # negligible and keeps full accuracy near the 0.5 threshold.
    o_ref[...] = 1.0 / (1.0 + jnp.exp(-z))


@functools.partial(jax.jit, static_argnames=("block_b",))
def finetune_head(cls_hs, w1, b1, w2, b2, *, block_b=4096):
    """cls_hs: (B, 768) f32 or bf16; w1: (32, 768); b1: (32,); w2: (1, 32); b2: (1,)."""
    B, H = cls_hs.shape
    assert H == HIDDEN

    # Tile rows: multiple of 128 (lane-dense output), capped by block_b, and
    # sized to ceil(B/2) so the grid has >= 2 steps whenever B allows it
    # (megacore sharding on v7x; harmless on single-TC v5e/v6e).
    tb = min(block_b, _round_up(pl.cdiv(B, 2), 128))
    tb = max(128, _round_up(tb, 128))
    num_tiles = pl.cdiv(B, tb)

    # Tiny, VMEM-resident parameters (fc1 weight in bf16 for the MXU).
    w1t = w1.T.astype(jnp.bfloat16)                        # (768, 32)
    b1r = b1.reshape(1, FC1_OUT).astype(jnp.float32)       # (1, 32)
    w2p = jnp.zeros((_W2_PAD, FC1_OUT), jnp.float32).at[0, :].set(
        w2.reshape(FC1_OUT).astype(jnp.float32))           # (8, 32)
    b2r = b2.reshape(1, 1).astype(jnp.float32)             # (1, 1)

    # VMEM budget: double-buffered streamed x tile + headroom, kept under the
    # 64 MiB physical VMEM of a v7x TensorCore (v5e/v6e have 128 MiB).
    x_tile_bytes = tb * HIDDEN * jnp.dtype(cls_hs.dtype).itemsize
    vmem_limit = min(64 * 1024 * 1024,
                     max(32 * 1024 * 1024, 2 * x_tile_bytes + 8 * 1024 * 1024))

    out_row = pl.pallas_call(
        finetune_head_kernel,
        out_shape=jax.ShapeDtypeStruct((1, B), jnp.float32),
        grid_spec=pltpu.PrefetchScalarGridSpec(
            num_scalar_prefetch=0,
            grid=(num_tiles,),
            in_specs=[
                pl.BlockSpec((tb, HIDDEN), lambda i: (i, 0)),        # streamed
                pl.BlockSpec((HIDDEN, FC1_OUT), lambda i: (0, 0)),   # resident
                pl.BlockSpec((1, FC1_OUT), lambda i: (0, 0)),        # resident
                pl.BlockSpec((_W2_PAD, FC1_OUT), lambda i: (0, 0)),  # resident
                pl.BlockSpec((1, 1), lambda i: (0, 0)),              # resident
            ],
            out_specs=pl.BlockSpec((1, tb), lambda i: (0, i)),
        ),
        compiler_params=pltpu.CompilerParams(
            dimension_semantics=("parallel",),
            vmem_limit_bytes=vmem_limit,
        ),
    )(cls_hs, w1t, b1r, w2p, b2r)

    # (1, B) lane-dense row -> (B, 1) column to match the nn.Module output.
    return out_row.reshape(B, FC2_OUT)


def finetune_head_ref(cls_hs, w1, b1, w2, b2):
    """Pure-JAX f32 reference of the same forward pass (eval mode)."""
    h = jnp.maximum(cls_hs @ w1.T + b1, 0.0)
    z = h @ w2.T + b2
    return jax.nn.sigmoid(z)


if __name__ == "__main__":
    key = jax.random.PRNGKey(0)
    k_x, k_w1, k_b1, k_w2, k_b2 = jax.random.split(key, 5)

    B = 200  # not a multiple of the tile -> exercises the ragged last block + 2-step grid

    # Synthetic pooled [CLS] hidden states (stand-in for the BERT output),
    # streamed in native f32 (the kernel casts to bf16 internally).
    cls_hs = jax.random.normal(k_x, (B, HIDDEN), dtype=jnp.float32)

    # Deterministic parameter init (nn.Linear-style uniform bounds).
    bound1 = 1.0 / (HIDDEN ** 0.5)
    w1 = jax.random.uniform(k_w1, (FC1_OUT, HIDDEN), jnp.float32, -bound1, bound1)
    b1 = jax.random.uniform(k_b1, (FC1_OUT,), jnp.float32, -bound1, bound1)
    bound2 = 1.0 / (FC1_OUT ** 0.5)
    w2 = jax.random.uniform(k_w2, (FC2_OUT, FC1_OUT), jnp.float32, -bound2, bound2)
    b2 = jax.random.uniform(k_b2, (FC2_OUT,), jnp.float32, -bound2, bound2)

    # Small block_b so the test runs >1 grid step while staying tiny.
    out = finetune_head(cls_hs, w1, b1, w2, b2, block_b=128)
    out = jax.block_until_ready(out)

    ref = finetune_head_ref(cls_hs, w1, b1, w2, b2)
    assert out.shape == (B, FC2_OUT), out.shape
    max_err = float(jnp.max(jnp.abs(out - ref)))
    # bf16 MXU inputs (exact sigmoid) vs a pure-f32 reference.
    assert max_err < 2e-2, f"mismatch vs reference: max abs err {max_err}"

    print("KERNEL_OK")
</pallas_src>

<mosaic_0001>
module attributes {stable_mosaic.version = 11 : i64} {
  func.func @finetune_head_kernel(%arg0: i32, %arg1: memref<128x768xf32, #tpu.memory_space<vmem>>, %arg2: memref<768x32xbf16, #tpu.memory_space<vmem>>, %arg3: memref<1x32xf32, #tpu.memory_space<vmem>>, %arg4: memref<8x32xf32, #tpu.memory_space<vmem>>, %arg5: memref<1x1xf32, #tpu.memory_space<vmem>>, %arg6: memref<1x128xf32, #tpu.memory_space<vmem>>) attributes {dimension_semantics = [#tpu.dimension_semantics<parallel>], iteration_bounds = array<i64: 2>, scalar_prefetch = 0 : i64, scratch_operands = 0 : i64, tpu.core_type = #tpu.core_type<tc>, window_params = [{transform_indices = @transform_0, window_bounds = array<i64: 128, 768>}, {pipeline_mode = #tpu.pipeline_mode<synchronous>, transform_indices = @transform_1, window_bounds = array<i64: 768, 32>}, {pipeline_mode = #tpu.pipeline_mode<synchronous>, transform_indices = @transform_2, window_bounds = array<i64: 1, 32>}, {pipeline_mode = #tpu.pipeline_mode<synchronous>, transform_indices = @transform_3, window_bounds = array<i64: 8, 32>}, {pipeline_mode = #tpu.pipeline_mode<synchronous>, transform_indices = @transform_4, window_bounds = array<i64: 1, 1>}, {transform_indices = @transform_5, window_bounds = array<i64: 1, 128>}]} {
    %c0 = arith.constant 0 : index
    %c0_0 = arith.constant 0 : index
    %0 = vector.load %arg1[%c0, %c0_0] : memref<128x768xf32, #tpu.memory_space<vmem>>, vector<128x768xf32>
    %1 = arith.truncf %0 : vector<128x768xf32> to vector<128x768xbf16>
    %c0_1 = arith.constant 0 : index
    %c0_2 = arith.constant 0 : index
    %2 = vector.load %arg2[%c0_1, %c0_2] : memref<768x32xbf16, #tpu.memory_space<vmem>>, vector<768x32xbf16>
    %cst = arith.constant dense<0.000000e+00> : vector<128x32xf32>
    %3 = tpu.matmul %1, %2, %cst {dimension_numbers = #tpu.dot_dimension_numbers<[1], [0], [0], [1], [0, 0, 1, 1], [], []>} : vector<128x768xbf16>, vector<768x32xbf16>, vector<128x32xf32> -> vector<128x32xf32>
    %c0_3 = arith.constant 0 : index
    %c0_4 = arith.constant 0 : index
    %4 = vector.load %arg3[%c0_3, %c0_4] : memref<1x32xf32, #tpu.memory_space<vmem>>, vector<1x32xf32>
    %5 = vector.broadcast %4 : vector<1x32xf32> to vector<128x32xf32>
    %6 = arith.addf %3, %5 : vector<128x32xf32>
    %cst_5 = arith.constant 0.000000e+00 : f32
    %7 = vector.broadcast %cst_5 : f32 to vector<128x32xf32>
    %8 = arith.maximumf %6, %7 : vector<128x32xf32>
    %c0_6 = arith.constant 0 : index
    %c0_7 = arith.constant 0 : index
    %9 = vector.load %arg4[%c0_6, %c0_7] : memref<8x32xf32, #tpu.memory_space<vmem>>, vector<8x32xf32>
    %cst_8 = arith.constant dense<0.000000e+00> : vector<8x128xf32>
    %10 = tpu.matmul %9, %8, %cst_8 {dimension_numbers = #tpu.dot_dimension_numbers<[1], [1], [0], [0], [0, 0, 1, 0], [], []>} : vector<8x32xf32>, vector<128x32xf32>, vector<8x128xf32> -> vector<8x128xf32>
    %11 = vector.extract_strided_slice %10 {offsets = [0, 0], sizes = [1, 128], strides = [1, 1]} : vector<8x128xf32> to vector<1x128xf32>
    %c0_9 = arith.constant 0 : index
    %c0_10 = arith.constant 0 : index
    %12 = vector.load %arg5[%c0_9, %c0_10] : memref<1x1xf32, #tpu.memory_space<vmem>>, vector<1x1xf32>
    %13 = vector.broadcast %12 : vector<1x1xf32> to vector<1x128xf32>
    %14 = arith.addf %11, %13 : vector<1x128xf32>
    %cst_11 = arith.constant 0.000000e+00 : f32
    %15 = vector.broadcast %cst_11 : f32 to vector<1x128xf32>
    %16 = arith.subf %15, %14 : vector<1x128xf32>
    %17 = math.exp %16 : vector<1x128xf32>
    %cst_12 = arith.constant 1.000000e+00 : f32
    %18 = vector.broadcast %cst_12 : f32 to vector<1x128xf32>
    %19 = arith.addf %18, %17 : vector<1x128xf32>
    %cst_13 = arith.constant 1.000000e+00 : f32
    %20 = vector.broadcast %cst_13 : f32 to vector<1x128xf32>
    %21 = arith.divf %20, %19 : vector<1x128xf32>
    %c0_14 = arith.constant 0 : index
    %c0_15 = arith.constant 0 : index
    %22 = vector.load %arg6[%c0_14, %c0_15] : memref<1x128xf32, #tpu.memory_space<vmem>>, vector<1x128xf32>
    tpu.vector_store %arg6[%c0_14, %c0_15], %21 {strides = array<i32>} : memref<1x128xf32, #tpu.memory_space<vmem>>, vector<1x128xf32>,
    return
  }
  func.func @transform_0(%arg0: i32) -> (i32, i32) {
    %c0_i32 = arith.constant 0 : i32
    %c0_i32_0 = arith.constant 0 : i32
    return %arg0, %c0_i32 : i32, i32
  }
  func.func @transform_1(%arg0: i32) -> (i32, i32) {
    %c0_i32 = arith.constant 0 : i32
    %c0_i32_0 = arith.constant 0 : i32
    %c0_i32_1 = arith.constant 0 : i32
    return %c0_i32, %c0_i32_0 : i32, i32
  }
  func.func @transform_2(%arg0: i32) -> (i32, i32) {
    %c0_i32 = arith.constant 0 : i32
    %c0_i32_0 = arith.constant 0 : i32
    %c0_i32_1 = arith.constant 0 : i32
    return %c0_i32, %c0_i32_0 : i32, i32
  }
  func.func @transform_3(%arg0: i32) -> (i32, i32) {
    %c0_i32 = arith.constant 0 : i32
    %c0_i32_0 = arith.constant 0 : i32
    %c0_i32_1 = arith.constant 0 : i32
    return %c0_i32, %c0_i32_0 : i32, i32
  }
  func.func @transform_4(%arg0: i32) -> (i32, i32) {
    %c0_i32 = arith.constant 0 : i32
    %c0_i32_0 = arith.constant 0 : i32
    %c0_i32_1 = arith.constant 0 : i32
    return %c0_i32, %c0_i32_0 : i32, i32
  }
  func.func @transform_5(%arg0: i32) -> (i32, i32) {
    %c0_i32 = arith.constant 0 : i32
    %c0_i32_0 = arith.constant 0 : i32
    return %c0_i32, %arg0 : i32, i32
  }
}

</mosaic_0001>

<llo_original>
// kernel: finetune_head.1
$region0: #{finetune_head.1}
  #allocation0 [shape = 'u32[]', space=smem, size = 0x4, offset = 0x4, fixed_abs, tag = 'smem constant byte address 0x4 - core index']
  #allocation1 [shape = 'u32[144,128]{1,0:T(1,128)}', space=vmem, size = 0x12000, scoped, tag = 'internal scratch']
  #allocation2 [shape = 'f32[1,1]{1,0:T(1,128)S(1)}', space=vmem, size = 0x200, scoped, tag = 'scoped memory for finetune_head.1']
  %s0 = inlined_call_operand.hbm [shape: f32[200,768], index: 0, kind: input, shape index: {}]
  %s1 = inlined_call_operand.vmem [shape: bf16[768,32], index: 1, kind: input, shape index: {}]
  %s2 = inlined_call_operand.vmem [shape: f32[1,32], index: 2, kind: input, shape index: {}]
  %s3 = inlined_call_operand.vmem [shape: f32[8,32], index: 3, kind: input, shape index: {}]
  %s4 = inlined_call_operand.<no memory space> [shape: f32[1,1], index: 4, kind: input, shape index: {}]
  %s5 = inlined_call_operand.hbm [shape: f32[1,200], index: 5, kind: output, shape index: {}]
  %s6 = sld [smem:[#allocation0]]
  $region57: #{finetune_head.1} parent=0
    _
  %s8 = ssub.s32 1, %s6
  %s9 = scalar_select 0, %s8, %s6
  %v10 = vstv %s4
  %11 = vst [vmem:[#allocation2] sm:$0x1] %v10
  $region1: #{finetune_head.1} parent=0
    #allocation3 [shape = 'u8[786432]{0}', space=vmem, size = 0xc0000, scoped, tag = 'input window, operand 0']
    #allocation4 [shape = 's32[2]{0}', space=sflag, size = 0x8, scoped, tag = 'scoped memory for finetune_head.1']
    #allocation5 [shape = 's32[2]{0}', space=sflag, size = 0x8, scoped, tag = 'scoped memory for finetune_head.1']
    #allocation6 [shape = 'u8[1024]{0}', space=vmem, size = 0x400, scoped, tag = 'output window, operand 0']
    %12 = vsyncpa [#allocation4], 0
    %s13 = scalar_lea.sflag [#allocation4], 1
    %14 = vsyncpa %s13, 0
    %15 = vsyncpa [#allocation5], 0
    %s16 = scalar_lea.sflag [#allocation5], 1
    %17 = vsyncpa %s16, 0
    loop: start=0, step=1, limit=4
    $region2: #{finetune_head.1} parent=1 // loop_pre_header
      _
    $region3: #{finetune_head.1} parent=1 // loop_header
      %s19 = sphi 0, %s23
      %p20 = scmp.ge.s32.totalorder %s19, 4
      %s29 = sphi 0, %s31
      %s32 = sphi 0, %s29
      %s33 = sphi 0, %s32
      %s49 = sphi 0, %s33
      %s53 = sphi 0, %s53
      %s55 = sphi 0, %s53
      %s56 = sphi 0, %s55
      %s70 = sphi 0, %s56
      %s74 = sphi 0, %s74
      %s76 = sphi 0, %s74
      %s77 = sphi 0, %s76
      %s91 = sphi 0, %s77
      %s95 = sphi 0, %s95
      %s97 = sphi 0, %s95
      %s98 = sphi 0, %s97
      %s112 = sphi 0, %s98
      %s116 = sphi 0, %s116
      %s118 = sphi 0, %s116
      %s119 = sphi 0, %s118
      %s133 = sphi 0, %s119
      %s139 = sphi 0, %s141
      %s142 = sphi 0, %s139
      %s143 = sphi 0, %s142
      %s159 = sphi 0, %s143
    $region4: #{finetune_head.1} parent=1 // loop_header_branch
      %22 = sbr.rel (%p20) target = $region8
    $region5: #{finetune_head.1} parent=1 // loop_body
      %s24 = ssub.s32 %s19, 1
      %s25 = ssub.s32 %s19, 2
      %s26 = sadd.s32 %s19, 1
      %s27 = ssub.s32 %s19, %s26
      %p28 = scmp.eq.s32.totalorder %s27, 0
      %s30 = sadd.s32 %s29, 1
      %s31 = scalar_select %p28, %s29, %s30
      %p34 = pneg %p28
      %p35 = scmp.eq.s32.totalorder %s19, 1
      %p36 = por %p34, %p35
      %p37 = scmp.ne.s32.totalorder %s29, %s32
      %p38 = scmp.eq.s32.totalorder %s19, 0
      %p39 = por %p37, %p38
      %p40 = scmp.ne.s32.totalorder %s29, %s32
      %p41 = scmp.eq.s32.totalorder %s24, 1
      %p42 = por %p40, %p41
      %p43 = scmp.ne.s32.totalorder %s32, %s33
      %p44 = scmp.eq.s32.totalorder %s24, 0
      %p45 = por %p43, %p44
      %p46 = scmp.ne.s32.totalorder %s32, %s33
      %p47 = scmp.eq.s32.totalorder %s25, 1
      %p48 = por %p46, %p47
      %p50 = scmp.ne.s32.totalorder %s33, %s49
      %p51 = scmp.eq.s32.totalorder %s25, 0
      %p52 = por %p50, %p51
      %s54 = sadd.s32 %s53, 1
      %p57 = scmp.eq.s32.totalorder %s19, 1
      %p58 = scmp.ne.s32.totalorder %s53, %s55
      %p59 = scmp.eq.s32.totalorder %s19, 0
      %p60 = por %p58, %p59
      %p61 = scmp.ne.s32.totalorder %s53, %s55
      %p62 = scmp.eq.s32.totalorder %s24, 1
      %p63 = por %p61, %p62
      %p64 = scmp.ne.s32.totalorder %s55, %s56
      %p65 = scmp.eq.s32.totalorder %s24, 0
      %p66 = por %p64, %p65
      %p67 = scmp.ne.s32.totalorder %s55, %s56
      %p68 = scmp.eq.s32.totalorder %s25, 1
      %p69 = por %p67, %p68
      %p71 = scmp.ne.s32.totalorder %s56, %s70
      %p72 = scmp.eq.s32.totalorder %s25, 0
      %p73 = por %p71, %p72
      %s75 = sadd.s32 %s74, 1
      %p78 = scmp.eq.s32.totalorder %s19, 1
      %p79 = scmp.ne.s32.totalorder %s74, %s76
      %p80 = scmp.eq.s32.totalorder %s19, 0
      %p81 = por %p79, %p80
      %p82 = scmp.ne.s32.totalorder %s74, %s76
      %p83 = scmp.eq.s32.totalorder %s24, 1
      %p84 = por %p82, %p83
      %p85 = scmp.ne.s32.totalorder %s76, %s77
      %p86 = scmp.eq.s32.totalorder %s24, 0
      %p87 = por %p85, %p86
      %p88 = scmp.ne.s32.totalorder %s76, %s77
      %p89 = scmp.eq.s32.totalorder %s25, 1
      %p90 = por %p88, %p89
      %p92 = scmp.ne.s32.totalorder %s77, %s91
      %p93 = scmp.eq.s32.totalorder %s25, 0
      %p94 = por %p92, %p93
      %s96 = sadd.s32 %s95, 1
      %p99 = scmp.eq.s32.totalorder %s19, 1
      %p100 = scmp.ne.s32.totalorder %s95, %s97
      %p101 = scmp.eq.s32.totalorder %s19, 0
      %p102 = por %p100, %p101
      %p103 = scmp.ne.s32.totalorder %s95, %s97
      %p104 = scmp.eq.s32.totalorder %s24, 1
      %p105 = por %p103, %p104
      %p106 = scmp.ne.s32.totalorder %s97, %s98
      %p107 = scmp.eq.s32.totalorder %s24, 0
      %p108 = por %p106, %p107
      %p109 = scmp.ne.s32.totalorder %s97, %s98
      %p110 = scmp.eq.s32.totalorder %s25, 1
      %p111 = por %p109, %p110
      %p113 = scmp.ne.s32.totalorder %s98, %s112
      %p114 = scmp.eq.s32.totalorder %s25, 0
      %p115 = por %p113, %p114
      %s117 = sadd.s32 %s116, 1
      %p120 = scmp.eq.s32.totalorder %s19, 1
      %p121 = scmp.ne.s32.totalorder %s116, %s118
      %p122 = scmp.eq.s32.totalorder %s19, 0
      %p123 = por %p121, %p122
      %p124 = scmp.ne.s32.totalorder %s116, %s118
      %p125 = scmp.eq.s32.totalorder %s24, 1
      %p126 = por %p124, %p125
      %p127 = scmp.ne.s32.totalorder %s118, %s119
      %p128 = scmp.eq.s32.totalorder %s24, 0
      %p129 = por %p127, %p128
      %p130 = scmp.ne.s32.totalorder %s118, %s119
      %p131 = scmp.eq.s32.totalorder %s25, 1
      %p132 = por %p130, %p131
      %p134 = scmp.ne.s32.totalorder %s119, %s133
      %p135 = scmp.eq.s32.totalorder %s25, 0
      %p136 = por %p134, %p135
      %s137 = ssub.s32 %s19, %s26
      %p138 = scmp.eq.s32.totalorder %s137, 0
      %s140 = sadd.s32 %s139, 1
      %s141 = scalar_select %p138, %s139, %s140
      %p144 = pneg %p138
      %p145 = scmp.eq.s32.totalorder %s19, 1
      %p146 = por %p144, %p145
      %p147 = scmp.ne.s32.totalorder %s139, %s142
      %p148 = scmp.eq.s32.totalorder %s19, 0
      %p149 = por %p147, %p148
      %p150 = scmp.ne.s32.totalorder %s139, %s142
      %p151 = scmp.eq.s32.totalorder %s24, 1
      %p152 = por %p150, %p151
      %p153 = scmp.ne.s32.totalorder %s142, %s143
      %p154 = scmp.eq.s32.totalorder %s24, 0
      %p155 = por %p153, %p154
      %p156 = scmp.ne.s32.totalorder %s142, %s143
      %p157 = scmp.eq.s32.totalorder %s25, 1
      %p158 = por %p156, %p157
      %p160 = scmp.ne.s32.totalorder %s143, %s159
      %p161 = scmp.eq.s32.totalorder %s25, 0
      %p162 = por %p160, %p161
      %p163 = scmp.le.s32.totalorder 1, %s19
      %p164 = scmp.lt.s32.totalorder %s19, 3
      %p165 = pnand %p163, %p164
      %p166 = pneg %p165
      // Predicated region
      $region9: #{finetune_head.1} parent=5 // pred_check
        _
      $region10: #{finetune_head.1} parent=5 // pred_check_branch
        %168 = sbr.rel (%p165) target = $region12
      $region11: #{finetune_head.1} parent=5 // pred_region
        %s169 = ssub.s32 %s19, 1
        // Predicated region
        $region13: #{finetune_head.1} parent=11 // pred_check
          %p170 = pneg %p66
        $region14: #{finetune_head.1} parent=11 // pred_check_branch
          %172 = sbr.rel (%p170) target = $region16
        $region15: #{finetune_head.1} parent=11 // pred_region
          _
        $region16: #{finetune_head.1} parent=11 // pred_fallthru
          _
        // Predicated region
        $region17: #{finetune_head.1} parent=11 // pred_check
          %p173 = pneg %p87
        $region18: #{finetune_head.1} parent=11 // pred_check_branch
          %175 = sbr.rel (%p173) target = $region20
        $region19: #{finetune_head.1} parent=11 // pred_region
          _
        $region20: #{finetune_head.1} parent=11 // pred_fallthru
          _
        // Predicated region
        $region21: #{finetune_head.1} parent=11 // pred_check
          %p176 = pneg %p108
        $region22: #{finetune_head.1} parent=11 // pred_check_branch
          %178 = sbr.rel (%p176) target = $region24
        $region23: #{finetune_head.1} parent=11 // pred_region
          _
        $region24: #{finetune_head.1} parent=11 // pred_fallthru
          _
        // Predicated region
        $region25: #{finetune_head.1} parent=11 // pred_check
          %p179 = pneg %p129
        $region26: #{finetune_head.1} parent=11 // pred_check_branch
          %181 = sbr.rel (%p179) target = $region28
        $region27: #{finetune_head.1} parent=11 // pred_region
          _
        $region28: #{finetune_head.1} parent=11 // pred_fallthru
          _
      $region12: #{finetune_head.1} parent=5 // pred_fallthru
        _
      %p182 = scmp.lt.s32.totalorder %s19, 2
      // Predicated region
      $region29: #{finetune_head.1} parent=5 // pred_check
        %p183 = pneg %p182
      $region30: #{finetune_head.1} parent=5 // pred_check_branch
        %185 = sbr.rel (%p183) target = $region32
      $region31: #{finetune_head.1} parent=5 // pred_region
        // Predicated region
        $region33: #{finetune_head.1} parent=31 // pred_check
          %p186 = pneg %p39
        $region34: #{finetune_head.1} parent=31 // pred_check_branch
          %188 = sbr.rel (%p186) target = $region36
        $region35: #{finetune_head.1} parent=31 // pred_region
          %s189 = sand.u32 %s29, 1
          %s190 = scalar_lea.sflag [#allocation4], %s189
          %s191 = sand.u32 %s29, 1
          %s192 = smul.addr %s191, 768
          %s193 = scalar_lea.vmem [#allocation3], %s192
          %s194 = smul.u32 16, %s19
          %s195 = ssub.s32 25, %s194
          %p196 = scmp.lt.s32.totalorder %s195, 16
          %s197 = scalar_select %p196, %s195, 16
          %s198 = smul.u32 128, %s197
          %s199 = smul.u32 %s198, 6
          %s201 = ssub.s32 12288, %s199
          %202 = vsyncadd %s190, %s201
          %p203 = scmp.ne.s32.totalorder 0, %s199
          %s204 = smul.addr %s194, 6
          %s205 = smul.addr %s204, 128
          %s206 = scalar_lea.hbm %s0, %s205
          %s207 = smul.u32 48, %s197
          %s208 = sshll.u32 %s193, 4
          %s209 = int_to_ptr.vmem [resolvable:$true] %s208
          %s210 = sshll.u32 %s207, 4
          %214 = dma.hbm_to_vmem [thread:$0]  (%p203), %s206, %s210, %s209, %s190, 768, 768, 48
        $region36: #{finetune_head.1} parent=31 // pred_fallthru
          _
      $region32: #{finetune_head.1} parent=5 // pred_fallthru
        _
      %p215 = scmp.le.s32.totalorder 1, %s19
      %p216 = scmp.lt.s32.totalorder %s19, 3
      %p217 = pnand %p215, %p216
      %p218 = pneg %p217
      // Predicated region
      $region37: #{finetune_head.1} parent=5 // pred_check
        _
      $region38: #{finetune_head.1} parent=5 // pred_check_branch
        %220 = sbr.rel (%p217) target = $region40
      $region39: #{finetune_head.1} parent=5 // pred_region
        %s221 = ssub.s32 %s19, 1
        %s222 = sand.u32 %s32, 1
        %s223 = scalar_lea.sflag [#allocation4], %s222
        %s224 = sand.u32 %s32, 1
        %s225 = smul.addr %s224, 768
        %s226 = scalar_lea.vmem [#allocation3], %s225
        // Predicated region
        $region41: #{finetune_head.1} parent=39 // pred_check
          %p227 = pneg %p45
        $region42: #{finetune_head.1} parent=39 // pred_check_branch
          %229 = sbr.rel (%p227) target = $region44
        $region43: #{finetune_head.1} parent=39 // pred_region
          %230 = dma.done %s223, 12288
        $region44: #{finetune_head.1} parent=39 // pred_fallthru
          _
        %s231 = sand.u32 %s32, 1
        %s232 = scalar_lea.sflag [#allocation4], %s231
        %s233 = sand.u32 %s32, 1
        %s234 = smul.addr %s233, 768
        %s235 = scalar_lea.vmem [#allocation3], %s234
        %p236 = pneg %p45
        %p237 = pneg %p42
        %p238 = pneg %p66
        %p239 = pneg %p63
        %p240 = pneg %p87
        %p241 = pneg %p84
        %p242 = pneg %p108
        %p243 = pneg %p105
        %p244 = pneg %p129
        %p245 = pneg %p126
        %p246 = pneg %p155
        %p247 = pneg %p152
        %s248 = sand.u32 %s142, 1
        %s249 = scalar_lea.sflag [#allocation5], %s248
        %s250 = sand.u32 %s142, 1
        %s251 = scalar_lea.vmem [#allocation6], %s250
        %s252 = smul.u32 16, %s24
        %s253 = ssub.s32 25, %s252
        %p254 = scmp.lt.s32.totalorder %s253, 16
        %s255 = scalar_select %p254, %s253, 16
        %s256 = smul.u32 128, %s255
        %s257 = smul.u32 %s256, 6
        %v259 = vld [vmem:[%s226] sm:$0xff]
        %v260 = vld [vmem:[%s226 + $0x8] sm:$0xff]
        %v261 = vld [vmem:[%s226 + $0x10] sm:$0xff]
        %v262 = vld [vmem:[%s226 + $0x18] sm:$0xff]
        %v263 = vld [vmem:[%s226 + $0x20] sm:$0xff]
        %v264 = vld [vmem:[%s226 + $0x28] sm:$0xff]
        %v265 = vld [vmem:[%s226 + $0x30] sm:$0xff]
        %v266 = vld [vmem:[%s226 + $0x38] sm:$0xff]
        %v267 = vld [vmem:[%s226 + $0x40] sm:$0xff]
        %v268 = vld [vmem:[%s226 + $0x48] sm:$0xff]
        %v269 = vld [vmem:[%s226 + $0x50] sm:$0xff]
        %v270 = vld [vmem:[%s226 + $0x58] sm:$0xff]
        %v271 = vld [vmem:[%s226 + $0x60] sm:$0xff]
        %v272 = vld [vmem:[%s226 + $0x68] sm:$0xff]
        %v273 = vld [vmem:[%s226 + $0x70] sm:$0xff]
        %v274 = vld [vmem:[%s226 + $0x78] sm:$0xff]
        %v275 = vld [vmem:[%s226 + $0x80] sm:$0xff]
        %v276 = vld [vmem:[%s226 + $0x88] sm:$0xff]
        %v277 = vld [vmem:[%s226 + $0x90] sm:$0xff]
        %v278 = vld [vmem:[%s226 + $0x98] sm:$0xff]
        %v279 = vld [vmem:[%s226 + $0xa0] sm:$0xff]
        %v280 = vld [vmem:[%s226 + $0xa8] sm:$0xff]
        %v281 = vld [vmem:[%s226 + $0xb0] sm:$0xff]
        %v282 = vld [vmem:[%s226 + $0xb8] sm:$0xff]
        %v283 = vld [vmem:[%s226 + $0xc0] sm:$0xff]
        %v284 = vld [vmem:[%s226 + $0xc8] sm:$0xff]
        %v285 = vld [vmem:[%s226 + $0xd0] sm:$0xff]
        %v286 = vld [vmem:[%s226 + $0xd8] sm:$0xff]
        %v287 = vld [vmem:[%s226 + $0xe0] sm:$0xff]
        %v288 = vld [vmem:[%s226 + $0xe8] sm:$0xff]
        %v289 = vld [vmem:[%s226 + $0xf0] sm:$0xff]
        %v290 = vld [vmem:[%s226 + $0xf8] sm:$0xff]
        %v291 = vld [vmem:[%s226 + $0x100] sm:$0xff]
        %v292 = vld [vmem:[%s226 + $0x108] sm:$0xff]
        %v293 = vld [vmem:[%s226 + $0x110] sm:$0xff]
        %v294 = vld [vmem:[%s226 + $0x118] sm:$0xff]
        %v295 = vld [vmem:[%s226 + $0x120] sm:$0xff]
        %v296 = vld [vmem:[%s226 + $0x128] sm:$0xff]
        %v297 = vld [vmem:[%s226 + $0x130] sm:$0xff]
        %v298 = vld [vmem:[%s226 + $0x138] sm:$0xff]
        %v299 = vld [vmem:[%s226 + $0x140] sm:$0xff]
        %v300 = vld [vmem:[%s226 + $0x148] sm:$0xff]
        %v301 = vld [vmem:[%s226 + $0x150] sm:$0xff]
        %v302 = vld [vmem:[%s226 + $0x158] sm:$0xff]
        %v303 = vld [vmem:[%s226 + $0x160] sm:$0xff]
        %v304 = vld [vmem:[%s226 + $0x168] sm:$0xff]
        %v305 = vld [vmem:[%s226 + $0x170] sm:$0xff]
        %v306 = vld [vmem:[%s226 + $0x178] sm:$0xff]
        %v307 = vld [vmem:[%s226 + $0x180] sm:$0xff]
        %v308 = vld [vmem:[%s226 + $0x188] sm:$0xff]
        %v309 = vld [vmem:[%s226 + $0x190] sm:$0xff]
        %v310 = vld [vmem:[%s226 + $0x198] sm:$0xff]
        %v311 = vld [vmem:[%s226 + $0x1a0] sm:$0xff]
        %v312 = vld [vmem:[%s226 + $0x1a8] sm:$0xff]
        %v313 = vld [vmem:[%s226 + $0x1b0] sm:$0xff]
        %v314 = vld [vmem:[%s226 + $0x1b8] sm:$0xff]
        %v315 = vld [vmem:[%s226 + $0x1c0] sm:$0xff]
        %v316 = vld [vmem:[%s226 + $0x1c8] sm:$0xff]
        %v317 = vld [vmem:[%s226 + $0x1d0] sm:$0xff]
        %v318 = vld [vmem:[%s226 + $0x1d8] sm:$0xff]
        %v319 = vld [vmem:[%s226 + $0x1e0] sm:$0xff]
        %v320 = vld [vmem:[%s226 + $0x1e8] sm:$0xff]
        %v321 = vld [vmem:[%s226 + $0x1f0] sm:$0xff]
        %v322 = vld [vmem:[%s226 + $0x1f8] sm:$0xff]
        %v323 = vld [vmem:[%s226 + $0x200] sm:$0xff]
        %v324 = vld [vmem:[%s226 + $0x208] sm:$0xff]
        %v325 = vld [vmem:[%s226 + $0x210] sm:$0xff]
        %v326 = vld [vmem:[%s226 + $0x218] sm:$0xff]
        %v327 = vld [vmem:[%s226 + $0x220] sm:$0xff]
        %v328 = vld [vmem:[%s226 + $0x228] sm:$0xff]
        %v329 = vld [vmem:[%s226 + $0x230] sm:$0xff]
        %v330 = vld [vmem:[%s226 + $0x238] sm:$0xff]
        %v331 = vld [vmem:[%s226 + $0x240] sm:$0xff]
        %v332 = vld [vmem:[%s226 + $0x248] sm:$0xff]
        %v333 = vld [vmem:[%s226 + $0x250] sm:$0xff]
        %v334 = vld [vmem:[%s226 + $0x258] sm:$0xff]
        %v335 = vld [vmem:[%s226 + $0x260] sm:$0xff]
        %v336 = vld [vmem:[%s226 + $0x268] sm:$0xff]
        %v337 = vld [vmem:[%s226 + $0x270] sm:$0xff]
        %v338 = vld [vmem:[%s226 + $0x278] sm:$0xff]
        %v339 = vld [vmem:[%s226 + $0x280] sm:$0xff]
        %v340 = vld [vmem:[%s226 + $0x288] sm:$0xff]
        %v341 = vld [vmem:[%s226 + $0x290] sm:$0xff]
        %v342 = vld [vmem:[%s226 + $0x298] sm:$0xff]
        %v343 = vld [vmem:[%s226 + $0x2a0] sm:$0xff]
        %v344 = vld [vmem:[%s226 + $0x2a8] sm:$0xff]
        %v345 = vld [vmem:[%s226 + $0x2b0] sm:$0xff]
        %v346 = vld [vmem:[%s226 + $0x2b8] sm:$0xff]
        %v347 = vld [vmem:[%s226 + $0x2c0] sm:$0xff]
        %v348 = vld [vmem:[%s226 + $0x2c8] sm:$0xff]
        %v349 = vld [vmem:[%s226 + $0x2d0] sm:$0xff]
        %v350 = vld [vmem:[%s226 + $0x2d8] sm:$0xff]
        %v351 = vld [vmem:[%s226 + $0x2e0] sm:$0xff]
        %v352 = vld [vmem:[%s226 + $0x2e8] sm:$0xff]
        %v353 = vld [vmem:[%s226 + $0x2f0] sm:$0xff]
        %v354 = vld [vmem:[%s226 + $0x2f8] sm:$0xff]
        %v355 = vpack.c.bf16 %v265, %v259
        %v356 = vpack.c.bf16 %v266, %v260
        %v357 = vpack.c.bf16 %v267, %v261
        %v358 = vpack.c.bf16 %v268, %v262
        %v359 = vpack.c.bf16 %v269, %v263
        %v360 = vpack.c.bf16 %v270, %v264
        %v361 = vpack.c.bf16 %v277, %v271
        %v362 = vpack.c.bf16 %v278, %v272
        %v363 = vpack.c.bf16 %v279, %v273
        %v364 = vpack.c.bf16 %v280, %v274
        %v365 = vpack.c.bf16 %v281, %v275
        %v366 = vpack.c.bf16 %v282, %v276
        %v367 = vpack.c.bf16 %v289, %v283
        %v368 = vpack.c.bf16 %v290, %v284
        %v369 = vpack.c.bf16 %v291, %v285
        %v370 = vpack.c.bf16 %v292, %v286
        %v371 = vpack.c.bf16 %v293, %v287
        %v372 = vpack.c.bf16 %v294, %v288
        %v373 = vpack.c.bf16 %v301, %v295
        %v374 = vpack.c.bf16 %v302, %v296
        %v375 = vpack.c.bf16 %v303, %v297
        %v376 = vpack.c.bf16 %v304, %v298
        %v377 = vpack.c.bf16 %v305, %v299
        %v378 = vpack.c.bf16 %v306, %v300
        %v379 = vpack.c.bf16 %v313, %v307
        %v380 = vpack.c.bf16 %v314, %v308
        %v381 = vpack.c.bf16 %v315, %v309
        %v382 = vpack.c.bf16 %v316, %v310
        %v383 = vpack.c.bf16 %v317, %v311
        %v384 = vpack.c.bf16 %v318, %v312
        %v385 = vpack.c.bf16 %v325, %v319
        %v386 = vpack.c.bf16 %v326, %v320
        %v387 = vpack.c.bf16 %v327, %v321
        %v388 = vpack.c.bf16 %v328, %v322
        %v389 = vpack.c.bf16 %v329, %v323
        %v390 = vpack.c.bf16 %v330, %v324
        %v391 = vpack.c.bf16 %v337, %v331
        %v392 = vpack.c.bf16 %v338, %v332
        %v393 = vpack.c.bf16 %v339, %v333
        %v394 = vpack.c.bf16 %v340, %v334
        %v395 = vpack.c.bf16 %v341, %v335
        %v396 = vpack.c.bf16 %v342, %v336
        %v397 = vpack.c.bf16 %v349, %v343
        %v398 = vpack.c.bf16 %v350, %v344
        %v399 = vpack.c.bf16 %v351, %v345
        %v400 = vpack.c.bf16 %v352, %v346
        %v401 = vpack.c.bf16 %v353, %v347
        %v402 = vpack.c.bf16 %v354, %v348
        %v403 = vld [vmem:[%s1] sm:$0xf]
        %v404 = vld [vmem:[%s1 + $0x4] sm:$0xf]
        %v405 = vld [vmem:[%s1 + $0x8] sm:$0xf]
        %v406 = vld [vmem:[%s1 + $0xc] sm:$0xf]
        %v407 = vld [vmem:[%s1 + $0x10] sm:$0xf]
        %v408 = vld [vmem:[%s1 + $0x14] sm:$0xf]
        %v409 = vld [vmem:[%s1 + $0x18] sm:$0xf]
        %v410 = vld [vmem:[%s1 + $0x1c] sm:$0xf]
        %v411 = vld [vmem:[%s1 + $0x20] sm:$0xf]
        %v412 = vld [vmem:[%s1 + $0x24] sm:$0xf]
        %v413 = vld [vmem:[%s1 + $0x28] sm:$0xf]
        %v414 = vld [vmem:[%s1 + $0x2c] sm:$0xf]
        %v415 = vld [vmem:[%s1 + $0x30] sm:$0xf]
        %v416 = vld [vmem:[%s1 + $0x34] sm:$0xf]
        %v417 = vld [vmem:[%s1 + $0x38] sm:$0xf]
        %v418 = vld [vmem:[%s1 + $0x3c] sm:$0xf]
        %v419 = vld [vmem:[%s1 + $0x40] sm:$0xf]
        %v420 = vld [vmem:[%s1 + $0x44] sm:$0xf]
        %v421 = vld [vmem:[%s1 + $0x48] sm:$0xf]
        %v422 = vld [vmem:[%s1 + $0x4c] sm:$0xf]
        %v423 = vld [vmem:[%s1 + $0x50] sm:$0xf]
        %v424 = vld [vmem:[%s1 + $0x54] sm:$0xf]
        %v425 = vld [vmem:[%s1 + $0x58] sm:$0xf]
        %v426 = vld [vmem:[%s1 + $0x5c] sm:$0xf]
        %v427 = vld [vmem:[%s1 + $0x60] sm:$0xf]
        %v428 = vld [vmem:[%s1 + $0x64] sm:$0xf]
        %v429 = vld [vmem:[%s1 + $0x68] sm:$0xf]
        %v430 = vld [vmem:[%s1 + $0x6c] sm:$0xf]
        %v431 = vld [vmem:[%s1 + $0x70] sm:$0xf]
        %v432 = vld [vmem:[%s1 + $0x74] sm:$0xf]
        %v433 = vld [vmem:[%s1 + $0x78] sm:$0xf]
        %v434 = vld [vmem:[%s1 + $0x7c] sm:$0xf]
        %v435 = vld [vmem:[%s1 + $0x80] sm:$0xf]
        %v436 = vld [vmem:[%s1 + $0x84] sm:$0xf]
        %v437 = vld [vmem:[%s1 + $0x88] sm:$0xf]
        %v438 = vld [vmem:[%s1 + $0x8c] sm:$0xf]
        %v439 = vld [vmem:[%s1 + $0x90] sm:$0xf]
        %v440 = vld [vmem:[%s1 + $0x94] sm:$0xf]
        %v441 = vld [vmem:[%s1 + $0x98] sm:$0xf]
        %v442 = vld [vmem:[%s1 + $0x9c] sm:$0xf]
        %v443 = vld [vmem:[%s1 + $0xa0] sm:$0xf]
        %v444 = vld [vmem:[%s1 + $0xa4] sm:$0xf]
        %v445 = vld [vmem:[%s1 + $0xa8] sm:$0xf]
        %v446 = vld [vmem:[%s1 + $0xac] sm:$0xf]
        %v447 = vld [vmem:[%s1 + $0xb0] sm:$0xf]
        %v448 = vld [vmem:[%s1 + $0xb4] sm:$0xf]
        %v449 = vld [vmem:[%s1 + $0xb8] sm:$0xf]
        %v450 = vld [vmem:[%s1 + $0xbc] sm:$0xf]
        %v451 = vld [vmem:[%s1 + $0xc0] sm:$0xf]
        %v452 = vld [vmem:[%s1 + $0xc4] sm:$0xf]
        %v453 = vld [vmem:[%s1 + $0xc8] sm:$0xf]
        %v454 = vld [vmem:[%s1 + $0xcc] sm:$0xf]
        %v455 = vld [vmem:[%s1 + $0xd0] sm:$0xf]
        %v456 = vld [vmem:[%s1 + $0xd4] sm:$0xf]
        %v457 = vld [vmem:[%s1 + $0xd8] sm:$0xf]
        %v458 = vld [vmem:[%s1 + $0xdc] sm:$0xf]
        %v459 = vld [vmem:[%s1 + $0xe0] sm:$0xf]
        %v460 = vld [vmem:[%s1 + $0xe4] sm:$0xf]
        %v461 = vld [vmem:[%s1 + $0xe8] sm:$0xf]
        %v462 = vld [vmem:[%s1 + $0xec] sm:$0xf]
        %v463 = vld [vmem:[%s1 + $0xf0] sm:$0xf]
        %v464 = vld [vmem:[%s1 + $0xf4] sm:$0xf]
        %v465 = vld [vmem:[%s1 + $0xf8] sm:$0xf]
        %v466 = vld [vmem:[%s1 + $0xfc] sm:$0xf]
        %v467 = vld [vmem:[%s1 + $0x100] sm:$0xf]
        %v468 = vld [vmem:[%s1 + $0x104] sm:$0xf]
        %v469 = vld [vmem:[%s1 + $0x108] sm:$0xf]
        %v470 = vld [vmem:[%s1 + $0x10c] sm:$0xf]
        %v471 = vld [vmem:[%s1 + $0x110] sm:$0xf]
        %v472 = vld [vmem:[%s1 + $0x114] sm:$0xf]
        %v473 = vld [vmem:[%s1 + $0x118] sm:$0xf]
        %v474 = vld [vmem:[%s1 + $0x11c] sm:$0xf]
        %v475 = vld [vmem:[%s1 + $0x120] sm:$0xf]
        %v476 = vld [vmem:[%s1 + $0x124] sm:$0xf]
        %v477 = vld [vmem:[%s1 + $0x128] sm:$0xf]
        %v478 = vld [vmem:[%s1 + $0x12c] sm:$0xf]
        %v479 = vld [vmem:[%s1 + $0x130] sm:$0xf]
        %v480 = vld [vmem:[%s1 + $0x134] sm:$0xf]
        %v481 = vld [vmem:[%s1 + $0x138] sm:$0xf]
        %v482 = vld [vmem:[%s1 + $0x13c] sm:$0xf]
        %v483 = vld [vmem:[%s1 + $0x140] sm:$0xf]
        %v484 = vld [vmem:[%s1 + $0x144] sm:$0xf]
        %v485 = vld [vmem:[%s1 + $0x148] sm:$0xf]
        %v486 = vld [vmem:[%s1 + $0x14c] sm:$0xf]
        %v487 = vld [vmem:[%s1 + $0x150] sm:$0xf]
        %v488 = vld [vmem:[%s1 + $0x154] sm:$0xf]
        %v489 = vld [vmem:[%s1 + $0x158] sm:$0xf]
        %v490 = vld [vmem:[%s1 + $0x15c] sm:$0xf]
        %v491 = vld [vmem:[%s1 + $0x160] sm:$0xf]
        %v492 = vld [vmem:[%s1 + $0x164] sm:$0xf]
        %v493 = vld [vmem:[%s1 + $0x168] sm:$0xf]
        %v494 = vld [vmem:[%s1 + $0x16c] sm:$0xf]
        %v495 = vld [vmem:[%s1 + $0x170] sm:$0xf]
        %v496 = vld [vmem:[%s1 + $0x174] sm:$0xf]
        %v497 = vld [vmem:[%s1 + $0x178] sm:$0xf]
        %v498 = vld [vmem:[%s1 + $0x17c] sm:$0xf]
        %v499 = vld [vmem:[%s2] sm:$0x1]
        %v501 = vlaneseq
        %v502 = vshrl.u32 %v501, 7
        %v503 = vsub.s32 0, %v502
        %v504 = vrot.slane %v499, %v503
        %v602 = vunpack.c.l.b16 %v403
        %v603 = vunpack.c.l.b16 %v404
        %v604 = vunpack.c.l.b16 %v405
        %v605 = vunpack.c.l.b16 %v406
        %v606 = vunpack.c.l.b16 %v407
        %v607 = vunpack.c.l.b16 %v408
        %v608 = vunpack.c.l.b16 %v409
        %v609 = vunpack.c.l.b16 %v410
        %v610 = vunpack.c.l.b16 %v411
        %v611 = vunpack.c.l.b16 %v412
        %v612 = vunpack.c.l.b16 %v413
        %v613 = vunpack.c.l.b16 %v414
        %v614 = vunpack.c.l.b16 %v415
        %v615 = vunpack.c.l.b16 %v416
        %v616 = vunpack.c.l.b16 %v417
        %v617 = vunpack.c.l.b16 %v418
        %v618 = vunpack.c.l.b16 %v419
        %v619 = vunpack.c.l.b16 %v420
        %v620 = vunpack.c.l.b16 %v421
        %v621 = vunpack.c.l.b16 %v422
        %v622 = vunpack.c.l.b16 %v423
        %v623 = vunpack.c.l.b16 %v424
        %v624 = vunpack.c.l.b16 %v425
        %v625 = vunpack.c.l.b16 %v426
        %v626 = vunpack.c.l.b16 %v427
        %v627 = vunpack.c.l.b16 %v428
        %v628 = vunpack.c.l.b16 %v429
        %v629 = vunpack.c.l.b16 %v430
        %v630 = vunpack.c.l.b16 %v431
        %v631 = vunpack.c.l.b16 %v432
        %v632 = vunpack.c.l.b16 %v433
        %v633 = vunpack.c.l.b16 %v434
        %v634 = vunpack.c.l.b16 %v435
        %v635 = vunpack.c.l.b16 %v436
        %v636 = vunpack.c.l.b16 %v437
        %v637 = vunpack.c.l.b16 %v438
        %v638 = vunpack.c.l.b16 %v439
        %v639 = vunpack.c.l.b16 %v440
        %v640 = vunpack.c.l.b16 %v441
        %v641 = vunpack.c.l.b16 %v442
        %v642 = vunpack.c.l.b16 %v443
        %v643 = vunpack.c.l.b16 %v444
        %v644 = vunpack.c.l.b16 %v445
        %v645 = vunpack.c.l.b16 %v446
        %v646 = vunpack.c.l.b16 %v447
        %v647 = vunpack.c.l.b16 %v448
        %v648 = vunpack.c.l.b16 %v449
        %v649 = vunpack.c.l.b16 %v450
        %v650 = vunpack.c.l.b16 %v451
        %v651 = vunpack.c.l.b16 %v452
        %v652 = vunpack.c.l.b16 %v453
        %v653 = vunpack.c.l.b16 %v454
        %v654 = vunpack.c.l.b16 %v455
        %v655 = vunpack.c.l.b16 %v456
        %v656 = vunpack.c.l.b16 %v457
        %v657 = vunpack.c.l.b16 %v458
        %v658 = vunpack.c.l.b16 %v459
        %v659 = vunpack.c.l.b16 %v460
        %v660 = vunpack.c.l.b16 %v461
        %v661 = vunpack.c.l.b16 %v462
        %v662 = vunpack.c.l.b16 %v463
        %v663 = vunpack.c.l.b16 %v464
        %v664 = vunpack.c.l.b16 %v465
        %v665 = vunpack.c.l.b16 %v466
        %v666 = vunpack.c.l.b16 %v467
        %v667 = vunpack.c.l.b16 %v468
        %v668 = vunpack.c.l.b16 %v469
        %v669 = vunpack.c.l.b16 %v470
        %v670 = vunpack.c.l.b16 %v471
        %v671 = vunpack.c.l.b16 %v472
        %v672 = vunpack.c.l.b16 %v473
        %v673 = vunpack.c.l.b16 %v474
        %v674 = vunpack.c.l.b16 %v475
        %v675 = vunpack.c.l.b16 %v476
        %v676 = vunpack.c.l.b16 %v477
        %v677 = vunpack.c.l.b16 %v478
        %v678 = vunpack.c.l.b16 %v479
        %v679 = vunpack.c.l.b16 %v480
        %v680 = vunpack.c.l.b16 %v481
        %v681 = vunpack.c.l.b16 %v482
        %v682 = vunpack.c.l.b16 %v483
        %v683 = vunpack.c.l.b16 %v484
        %v684 = vunpack.c.l.b16 %v485
        %v685 = vunpack.c.l.b16 %v486
        %v686 = vunpack.c.l.b16 %v487
        %v687 = vunpack.c.l.b16 %v488
        %v688 = vunpack.c.l.b16 %v489
        %v689 = vunpack.c.l.b16 %v490
        %v690 = vunpack.c.l.b16 %v491
        %v691 = vunpack.c.l.b16 %v492
        %v692 = vunpack.c.l.b16 %v493
        %v693 = vunpack.c.l.b16 %v494
        %v694 = vunpack.c.l.b16 %v495
        %v695 = vunpack.c.l.b16 %v496
        %v696 = vunpack.c.l.b16 %v497
        %v697 = vunpack.c.l.b16 %v498
        %v698 = vpack.c.b16 %v603, %v602
        %v699 = vpack.c.b16 %v605, %v604
        %v700 = vpack.c.b16 %v607, %v606
        %v701 = vpack.c.b16 %v609, %v608
        %v702 = vpack.c.b16 %v611, %v610
        %v703 = vpack.c.b16 %v613, %v612
        %v704 = vpack.c.b16 %v615, %v614
        %v705 = vpack.c.b16 %v617, %v616
        %v706 = vpack.c.b16 %v619, %v618
        %v707 = vpack.c.b16 %v621, %v620
        %v708 = vpack.c.b16 %v623, %v622
        %v709 = vpack.c.b16 %v625, %v624
        %v710 = vpack.c.b16 %v627, %v626
        %v711 = vpack.c.b16 %v629, %v628
        %v712 = vpack.c.b16 %v631, %v630
        %v713 = vpack.c.b16 %v633, %v632
        %v714 = vpack.c.b16 %v635, %v634
        %v715 = vpack.c.b16 %v637, %v636
        %v716 = vpack.c.b16 %v639, %v638
        %v717 = vpack.c.b16 %v641, %v640
        %v718 = vpack.c.b16 %v643, %v642
        %v719 = vpack.c.b16 %v645, %v644
        %v720 = vpack.c.b16 %v647, %v646
        %v721 = vpack.c.b16 %v649, %v648
        %v722 = vpack.c.b16 %v651, %v650
        %v723 = vpack.c.b16 %v653, %v652
        %v724 = vpack.c.b16 %v655, %v654
        %v725 = vpack.c.b16 %v657, %v656
        %v726 = vpack.c.b16 %v659, %v658
        %v727 = vpack.c.b16 %v661, %v660
        %v728 = vpack.c.b16 %v663, %v662
        %v729 = vpack.c.b16 %v665, %v664
        %v730 = vpack.c.b16 %v667, %v666
        %v731 = vpack.c.b16 %v669, %v668
        %v732 = vpack.c.b16 %v671, %v670
        %v733 = vpack.c.b16 %v673, %v672
        %v734 = vpack.c.b16 %v675, %v674
        %v735 = vpack.c.b16 %v677, %v676
        %v736 = vpack.c.b16 %v679, %v678
        %v737 = vpack.c.b16 %v681, %v680
        %v738 = vpack.c.b16 %v683, %v682
        %v739 = vpack.c.b16 %v685, %v684
        %v740 = vpack.c.b16 %v687, %v686
        %v741 = vpack.c.b16 %v689, %v688
        %v742 = vpack.c.b16 %v691, %v690
        %v743 = vpack.c.b16 %v693, %v692
        %v744 = vpack.c.b16 %v695, %v694
        %v745 = vpack.c.b16 %v697, %v696
        %794 = vmatprep.subr.bf16.mxu0 0
        %795 = vmatpush1.bf16.msra.mxu0 %v698
        %796 = vmatprep.subr.bf16.mxu0 0
        %797 = vmatpush1.bf16.msra.mxu0 %v699
        %798 = vmatprep.subr.bf16.mxu0 0
        %799 = vmatpush1.bf16.msra.mxu0 %v700
        %800 = vmatprep.subr.bf16.mxu0 0
        %801 = vmatpush1.bf16.msra.mxu0 %v701
        %802 = vmatprep.subr.bf16.mxu0 0
        %803 = vmatpush1.bf16.msra.mxu0 %v702
        %804 = vmatprep.subr.bf16.mxu0 0
        %805 = vmatpush1.bf16.msra.mxu0 %v703
        %806 = vmatprep.subr.bf16.mxu0 0
        %807 = vmatpush1.bf16.msra.mxu0 %v704
        %808 = vmatprep.subr.bf16.mxu0 0
        %809 = vmatpush1.bf16.msra.mxu0 %v705
        %810 = vmatprep.subr.bf16.mxu0 0
        %811 = vmatpush1.bf16.msra.mxu0 %v706
        %812 = vmatprep.subr.bf16.mxu0 0
        %813 = vmatpush1.bf16.msra.mxu0 %v707
        %814 = vmatprep.subr.bf16.mxu0 0
        %815 = vmatpush1.bf16.msra.mxu0 %v708
        %816 = vmatprep.subr.bf16.mxu0 0
        %817 = vmatpush1.bf16.msra.mxu0 %v709
        %818 = vmatprep.subr.bf16.mxu0 0
        %819 = vmatpush1.bf16.msra.mxu0 %v710
        %820 = vmatprep.subr.bf16.mxu0 0
        %821 = vmatpush1.bf16.msra.mxu0 %v711
        %822 = vmatprep.subr.bf16.mxu0 0
        %823 = vmatpush1.bf16.msra.mxu0 %v712
        %824 = vmatprep.subr.bf16.mxu0 0
        %825 = vmatpush1.bf16.msra.mxu0 %v713
        %826 = vmatprep.mubr.bf16.mxu0 %v356
        %827 = vmatmul.mubr.bf16.gmra.mrb[0].mxu0 %v355
        %v828 = vpop.f32.mrb[0].mxu0
        %v829 = vadd.f32 %v504, %v828
        %v830 = vpop.f32.mrb[0].mxu0
        %v831 = vpop.f32.mrb[0].mxu0
        %v832 = vadd.f32 %v504, %v831
        %v833 = vpop.f32.mrb[0].mxu0
        %834 = vmatprep.mubr.bf16.mxu0 %v362
        %835 = vmatmul.mubr.bf16.gmra.mrb[0].mxu0 %v361
        %v836 = vpop.f32.mrb[0].mxu0
        %v837 = vadd.f32 %v504, %v836
        %v838 = vpop.f32.mrb[0].mxu0
        %v839 = vpop.f32.mrb[0].mxu0
        %v840 = vadd.f32 %v504, %v839
        %v841 = vpop.f32.mrb[0].mxu0
        %842 = vmatprep.mubr.bf16.mxu0 %v368
        %843 = vmatmul.mubr.bf16.gmra.mrb[0].mxu0 %v367
        %v844 = vpop.f32.mrb[0].mxu0
        %v845 = vadd.f32 %v504, %v844
        %v846 = vpop.f32.mrb[0].mxu0
        %v847 = vpop.f32.mrb[0].mxu0
        %v848 = vadd.f32 %v504, %v847
        %v849 = vpop.f32.mrb[0].mxu0
        %850 = vmatprep.mubr.bf16.mxu0 %v374
        %851 = vmatmul.mubr.bf16.gmra.mrb[0].mxu0 %v373
        %v852 = vpop.f32.mrb[0].mxu0
        %v853 = vadd.f32 %v504, %v852
        %v854 = vpop.f32.mrb[0].mxu0
        %v855 = vpop.f32.mrb[0].mxu0
        %v856 = vadd.f32 %v504, %v855
        %v857 = vpop.f32.mrb[0].mxu0
        %858 = vmatprep.mubr.bf16.mxu0 %v380
        %859 = vmatmul.mubr.bf16.gmra.mrb[0].mxu0 %v379
        %v860 = vpop.f32.mrb[0].mxu0
        %v861 = vadd.f32 %v504, %v860
        %v862 = vpop.f32.mrb[0].mxu0
        %v863 = vpop.f32.mrb[0].mxu0
        %v864 = vadd.f32 %v504, %v863
        %v865 = vpop.f32.mrb[0].mxu0
        %866 = vmatprep.mubr.bf16.mxu0 %v386
        %867 = vmatmul.mubr.bf16.gmra.mrb[0].mxu0 %v385
        %v868 = vpop.f32.mrb[0].mxu0
        %v869 = vadd.f32 %v504, %v868
        %v870 = vpop.f32.mrb[0].mxu0
        %v871 = vpop.f32.mrb[0].mxu0
        %v872 = vadd.f32 %v504, %v871
        %v873 = vpop.f32.mrb[0].mxu0
        %874 = vmatprep.mubr.bf16.mxu0 %v392
        %875 = vmatmul.mubr.bf16.gmra.mrb[0].mxu0 %v391
        %v876 = vpop.f32.mrb[0].mxu0
        %v877 = vadd.f32 %v504, %v876
        %v878 = vpop.f32.mrb[0].mxu0
        %v879 = vpop.f32.mrb[0].mxu0
        %v880 = vadd.f32 %v504, %v879
        %v881 = vpop.f32.mrb[0].mxu0
        %882 = vmatprep.mubr.bf16.mxu0 %v398
        %883 = vmatmul.mubr.bf16.gmra.mrb[0].mxu0 %v397
        %v884 = vpop.f32.mrb[0].mxu0
        %v885 = vadd.f32 %v504, %v884
        %v886 = vpop.f32.mrb[0].mxu0
        %v887 = vpop.f32.mrb[0].mxu0
        %v888 = vadd.f32 %v504, %v887
        %v889 = vpop.f32.mrb[0].mxu0
        %890 = vdwg.mxu0
        %891 = vmatprep.subr.bf16.mxu0 0
        %892 = vmatpush1.bf16.msra.mxu0 %v714
        %893 = vmatprep.subr.bf16.mxu0 0
        %894 = vmatpush1.bf16.msra.mxu0 %v715
        %895 = vmatprep.subr.bf16.mxu0 0
        %896 = vmatpush1.bf16.msra.mxu0 %v716
        %897 = vmatprep.subr.bf16.mxu0 0
        %898 = vmatpush1.bf16.msra.mxu0 %v717
        %899 = vmatprep.subr.bf16.mxu0 0
        %900 = vmatpush1.bf16.msra.mxu0 %v718
        %901 = vmatprep.subr.bf16.mxu0 0
        %902 = vmatpush1.bf16.msra.mxu0 %v719
        %903 = vmatprep.subr.bf16.mxu0 0
        %904 = vmatpush1.bf16.msra.mxu0 %v720
        %905 = vmatprep.subr.bf16.mxu0 0
        %906 = vmatpush1.bf16.msra.mxu0 %v721
        %907 = vmatprep.subr.bf16.mxu0 0
        %908 = vmatpush1.bf16.msra.mxu0 %v722
        %909 = vmatprep.subr.bf16.mxu0 0
        %910 = vmatpush1.bf16.msra.mxu0 %v723
        %911 = vmatprep.subr.bf16.mxu0 0
        %912 = vmatpush1.bf16.msra.mxu0 %v724
        %913 = vmatprep.subr.bf16.mxu0 0
        %914 = vmatpush1.bf16.msra.mxu0 %v725
        %915 = vmatprep.subr.bf16.mxu0 0
        %916 = vmatpush1.bf16.msra.mxu0 %v726
        %917 = vmatprep.subr.bf16.mxu0 0
        %918 = vmatpush1.bf16.msra.mxu0 %v727
        %919 = vmatprep.subr.bf16.mxu0 0
        %920 = vmatpush1.bf16.msra.mxu0 %v728
        %921 = vmatprep.subr.bf16.mxu0 0
        %922 = vmatpush1.bf16.msra.mxu0 %v729
        %923 = vmatprep.mubr.bf16.mxu0 %v358
        %924 = vmatmul.mubr.bf16.gmra.mrb[0].mxu0 %v357
        %v925 = vpop.f32.mrb[0].mxu0
        %v926 = vadd.f32 %v829, %v925
        %v927 = vpop.f32.mrb[0].mxu0
        %v928 = vpop.f32.mrb[0].mxu0
        %v929 = vadd.f32 %v832, %v928
        %v930 = vpop.f32.mrb[0].mxu0
        %931 = vmatprep.mubr.bf16.mxu0 %v364
        %932 = vmatmul.mubr.bf16.gmra.mrb[0].mxu0 %v363
        %v933 = vpop.f32.mrb[0].mxu0
        %v934 = vadd.f32 %v837, %v933
        %v935 = vpop.f32.mrb[0].mxu0
        %v936 = vpop.f32.mrb[0].mxu0
        %v937 = vadd.f32 %v840, %v936
        %v938 = vpop.f32.mrb[0].mxu0
        %939 = vmatprep.mubr.bf16.mxu0 %v370
        %940 = vmatmul.mubr.bf16.gmra.mrb[0].mxu0 %v369
        %v941 = vpop.f32.mrb[0].mxu0
        %v942 = vadd.f32 %v845, %v941
        %v943 = vpop.f32.mrb[0].mxu0
        %v944 = vpop.f32.mrb[0].mxu0
        %v945 = vadd.f32 %v848, %v944
        %v946 = vpop.f32.mrb[0].mxu0
        %947 = vmatprep.mubr.bf16.mxu0 %v376
        %948 = vmatmul.mubr.bf16.gmra.mrb[0].mxu0 %v375
        %v949 = vpop.f32.mrb[0].mxu0
        %v950 = vadd.f32 %v853, %v949
        %v951 = vpop.f32.mrb[0].mxu0
        %v952 = vpop.f32.mrb[0].mxu0
        %v953 = vadd.f32 %v856, %v952
        %v954 = vpop.f32.mrb[0].mxu0
        %955 = vmatprep.mubr.bf16.mxu0 %v382
        %956 = vmatmul.mubr.bf16.gmra.mrb[0].mxu0 %v381
        %v957 = vpop.f32.mrb[0].mxu0
        %v958 = vadd.f32 %v861, %v957
        %v959 = vpop.f32.mrb[0].mxu0
        %v960 = vpop.f32.mrb[0].mxu0
        %v961 = vadd.f32 %v864, %v960
        %v962 = vpop.f32.mrb[0].mxu0
        %963 = vmatprep.mubr.bf16.mxu0 %v388
        %964 = vmatmul.mubr.bf16.gmra.mrb[0].mxu0 %v387
        %v965 = vpop.f32.mrb[0].mxu0
        %v966 = vadd.f32 %v869, %v965
        %v967 = vpop.f32.mrb[0].mxu0
        %v968 = vpop.f32.mrb[0].mxu0
        %v969 = vadd.f32 %v872, %v968
        %v970 = vpop.f32.mrb[0].mxu0
        %971 = vmatprep.mubr.bf16.mxu0 %v394
        %972 = vmatmul.mubr.bf16.gmra.mrb[0].mxu0 %v393
        %v973 = vpop.f32.mrb[0].mxu0
        %v974 = vadd.f32 %v877, %v973
        %v975 = vpop.f32.mrb[0].mxu0
        %v976 = vpop.f32.mrb[0].mxu0
        %v977 = vadd.f32 %v880, %v976
        %v978 = vpop.f32.mrb[0].mxu0
        %979 = vmatprep.mubr.bf16.mxu0 %v400
        %980 = vmatmul.mubr.bf16.gmra.mrb[0].mxu0 %v399
        %v981 = vpop.f32.mrb[0].mxu0
        %v982 = vadd.f32 %v885, %v981
        %v983 = vpop.f32.mrb[0].mxu0
        %v984 = vpop.f32.mrb[0].mxu0
        %v985 = vadd.f32 %v888, %v984
        %v986 = vpop.f32.mrb[0].mxu0
        %987 = vdwg.mxu0
        %988 = vmatprep.subr.bf16.mxu0 0
        %989 = vmatpush1.bf16.msra.mxu0 %v730
        %990 = vmatprep.subr.bf16.mxu0 0
        %991 = vmatpush1.bf16.msra.mxu0 %v731
        %992 = vmatprep.subr.bf16.mxu0 0
        %993 = vmatpush1.bf16.msra.mxu0 %v732
        %994 = vmatprep.subr.bf16.mxu0 0
        %995 = vmatpush1.bf16.msra.mxu0 %v733
        %996 = vmatprep.subr.bf16.mxu0 0
        %997 = vmatpush1.bf16.msra.mxu0 %v734
        %998 = vmatprep.subr.bf16.mxu0 0
        %999 = vmatpush1.bf16.msra.mxu0 %v735
        %1000 = vmatprep.subr.bf16.mxu0 0
        %1001 = vmatpush1.bf16.msra.mxu0 %v736
        %1002 = vmatprep.subr.bf16.mxu0 0
        %1003 = vmatpush1.bf16.msra.mxu0 %v737
        %1004 = vmatprep.subr.bf16.mxu0 0
        %1005 = vmatpush1.bf16.msra.mxu0 %v738
        %1006 = vmatprep.subr.bf16.mxu0 0
        %1007 = vmatpush1.bf16.msra.mxu0 %v739
        %1008 = vmatprep.subr.bf16.mxu0 0
        %1009 = vmatpush1.bf16.msra.mxu0 %v740
        %1010 = vmatprep.subr.bf16.mxu0 0
        %1011 = vmatpush1.bf16.msra.mxu0 %v741
        %1012 = vmatprep.subr.bf16.mxu0 0
        %1013 = vmatpush1.bf16.msra.mxu0 %v742
        %1014 = vmatprep.subr.bf16.mxu0 0
        %1015 = vmatpush1.bf16.msra.mxu0 %v743
        %1016 = vmatprep.subr.bf16.mxu0 0
        %1017 = vmatpush1.bf16.msra.mxu0 %v744
        %1018 = vmatprep.subr.bf16.mxu0 0
        %1019 = vmatpush1.bf16.msra.mxu0 %v745
        %1020 = vmatprep.mubr.bf16.mxu0 %v360
        %1021 = vmatmul.mubr.bf16.gmra.mrb[0].mxu0 %v359
        %v1022 = vpop.f32.mrb[0].mxu0
        %v1023 = vadd.f32 %v926, %v1022
        %v1024 = vpop.f32.mrb[0].mxu0
        %v1025 = vpop.f32.mrb[0].mxu0
        %v1026 = vadd.f32 %v929, %v1025
        %v1027 = vpop.f32.mrb[0].mxu0
        %1028 = vmatprep.mubr.bf16.mxu0 %v366
        %1029 = vmatmul.mubr.bf16.gmra.mrb[0].mxu0 %v365
        %v1030 = vpop.f32.mrb[0].mxu0
        %v1031 = vadd.f32 %v934, %v1030
        %v1032 = vpop.f32.mrb[0].mxu0
        %v1033 = vpop.f32.mrb[0].mxu0
        %v1034 = vadd.f32 %v937, %v1033
        %v1035 = vpop.f32.mrb[0].mxu0
        %1036 = vmatprep.mubr.bf16.mxu0 %v372
        %1037 = vmatmul.mubr.bf16.gmra.mrb[0].mxu0 %v371
        %v1038 = vpop.f32.mrb[0].mxu0
        %v1039 = vadd.f32 %v942, %v1038
        %v1040 = vpop.f32.mrb[0].mxu0
        %v1041 = vpop.f32.mrb[0].mxu0
        %v1042 = vadd.f32 %v945, %v1041
        %v1043 = vpop.f32.mrb[0].mxu0
        %1044 = vmatprep.mubr.bf16.mxu0 %v378
        %1045 = vmatmul.mubr.bf16.gmra.mrb[0].mxu0 %v377
        %v1046 = vpop.f32.mrb[0].mxu0
        %v1047 = vadd.f32 %v950, %v1046
        %v1048 = vpop.f32.mrb[0].mxu0
        %v1049 = vpop.f32.mrb[0].mxu0
        %v1050 = vadd.f32 %v953, %v1049
        %v1051 = vpop.f32.mrb[0].mxu0
        %1052 = vmatprep.mubr.bf16.mxu0 %v384
        %1053 = vmatmul.mubr.bf16.gmra.mrb[0].mxu0 %v383
        %v1054 = vpop.f32.mrb[0].mxu0
        %v1055 = vadd.f32 %v958, %v1054
        %v1056 = vpop.f32.mrb[0].mxu0
        %v1057 = vpop.f32.mrb[0].mxu0
        %v1058 = vadd.f32 %v961, %v1057
        %v1059 = vpop.f32.mrb[0].mxu0
        %1060 = vmatprep.mubr.bf16.mxu0 %v390
        %1061 = vmatmul.mubr.bf16.gmra.mrb[0].mxu0 %v389
        %v1062 = vpop.f32.mrb[0].mxu0
        %v1063 = vadd.f32 %v966, %v1062
        %v1064 = vpop.f32.mrb[0].mxu0
        %v1065 = vpop.f32.mrb[0].mxu0
        %v1066 = vadd.f32 %v969, %v1065
        %v1067 = vpop.f32.mrb[0].mxu0
        %1068 = vmatprep.mubr.bf16.mxu0 %v396
        %1069 = vmatmul.mubr.bf16.gmra.mrb[0].mxu0 %v395
        %v1070 = vpop.f32.mrb[0].mxu0
        %v1071 = vadd.f32 %v974, %v1070
        %v1072 = vpop.f32.mrb[0].mxu0
        %v1073 = vpop.f32.mrb[0].mxu0
        %v1074 = vadd.f32 %v977, %v1073
        %v1075 = vpop.f32.mrb[0].mxu0
        %1076 = vmatprep.mubr.bf16.mxu0 %v402
        %1077 = vmatmul.mubr.bf16.gmra.mrb[0].mxu0 %v401
        %v1078 = vpop.f32.mrb[0].mxu0
        %v1079 = vadd.f32 %v982, %v1078
        %v1080 = vpop.f32.mrb[0].mxu0
        %v1081 = vpop.f32.mrb[0].mxu0
        %v1082 = vadd.f32 %v985, %v1081
        %v1083 = vpop.f32.mrb[0].mxu0
        %1084 = vdwg.mxu0
        %v1085 = vmax.f32 %v1023, 0.0
        %v1086 = vmax.f32 %v1026, 0.0
        %v1087 = vmax.f32 %v1031, 0.0
        %v1088 = vmax.f32 %v1034, 0.0
        %v1089 = vmax.f32 %v1039, 0.0
        %v1090 = vmax.f32 %v1042, 0.0
        %v1091 = vmax.f32 %v1047, 0.0
        %v1092 = vmax.f32 %v1050, 0.0
        %v1093 = vmax.f32 %v1055, 0.0
        %v1094 = vmax.f32 %v1058, 0.0
        %v1095 = vmax.f32 %v1063, 0.0
        %v1096 = vmax.f32 %v1066, 0.0
        %v1097 = vmax.f32 %v1071, 0.0
        %v1098 = vmax.f32 %v1074, 0.0
        %v1099 = vmax.f32 %v1079, 0.0
        %v1100 = vmax.f32 %v1082, 0.0
        %v1101 = vld [vmem:[%s3] sm:$0xff]
        %vm1102 = vcmask 261120
        %v1104 = vsel %vm1102, %v1101, 0
        %v1107 = vsel %vm1102, %v1085, 0
        %v1110 = vsel %vm1102, %v1086, 0
        %v1113 = vsel %vm1102, %v1087, 0
        %v1116 = vsel %vm1102, %v1088, 0
        %v1119 = vsel %vm1102, %v1089, 0
        %v1122 = vsel %vm1102, %v1090, 0
        %v1125 = vsel %vm1102, %v1091, 0
        %v1128 = vsel %vm1102, %v1092, 0
        %v1131 = vsel %vm1102, %v1093, 0
        %v1134 = vsel %vm1102, %v1094, 0
        %v1137 = vsel %vm1102, %v1095, 0
        %v1140 = vsel %vm1102, %v1096, 0
        %v1143 = vsel %vm1102, %v1097, 0
        %v1146 = vsel %vm1102, %v1098, 0
        %v1149 = vsel %vm1102, %v1099, 0
        %v1152 = vsel %vm1102, %v1100, 0
        %1154 = vmatprep.subr.mxu0 0.0
        %1155 = vmatpush1.xpose.msra.mxu0 %v1107
        %1156 = vmatprep.subr.mxu0 0.0
        %1157 = vmatpush1.xpose.msra.mxu0 %v1110
        %1158 = vmatprep.subr.mxu0 0.0
        %1159 = vmatpush1.xpose.msra.mxu0 %v1113
        %1160 = vmatprep.subr.mxu0 0.0
        %1161 = vmatpush1.xpose.msra.mxu0 %v1116
        %1162 = vmatprep.subr.mxu0 0.0
        %1163 = vmatpush1.xpose.msra.mxu0 %v1119
        %1164 = vmatprep.subr.mxu0 0.0
        %1165 = vmatpush1.xpose.msra.mxu0 %v1122
        %1166 = vmatprep.subr.mxu0 0.0
        %1167 = vmatpush1.xpose.msra.mxu0 %v1125
        %1168 = vmatprep.subr.mxu0 0.0
        %1169 = vmatpush1.xpose.msra.mxu0 %v1128
        %1170 = vmatprep.subr.mxu0 0.0
        %1171 = vmatpush1.xpose.msra.mxu0 %v1131
        %1172 = vmatprep.subr.mxu0 0.0
        %1173 = vmatpush1.xpose.msra.mxu0 %v1134
        %1174 = vmatprep.subr.mxu0 0.0
        %1175 = vmatpush1.xpose.msra.mxu0 %v1137
        %1176 = vmatprep.subr.mxu0 0.0
        %1177 = vmatpush1.xpose.msra.mxu0 %v1140
        %1178 = vmatprep.subr.mxu0 0.0
        %1179 = vmatpush1.xpose.msra.mxu0 %v1143
        %1180 = vmatprep.subr.mxu0 0.0
        %1181 = vmatpush1.xpose.msra.mxu0 %v1146
        %1182 = vmatprep.subr.mxu0 0.0
        %1183 = vmatpush1.xpose.msra.mxu0 %v1149
        %1184 = vmatprep.subr.mxu0 0.0
        %1185 = vmatpush1.xpose.msra.mxu0 %v1152
        %1186 = vmatprep.subr.mxu0 0.0
        %1187 = vmatpush1.xpose.msra.mxu0 0.0
        %1188 = vmatprep.subr.mxu0 0.0
        %1189 = vmatpush1.xpose.msra.mxu0 0.0
        %1190 = vmatprep.subr.mxu0 0.0
        %1191 = vmatpush1.xpose.msra.mxu0 0.0
        %1192 = vmatprep.subr.mxu0 0.0
        %1193 = vmatpush1.xpose.msra.mxu0 0.0
        %1194 = vmatprep.subr.mxu0 0.0
        %1195 = vmatpush1.xpose.msra.mxu0 0.0
        %1196 = vmatprep.subr.mxu0 0.0
        %1197 = vmatpush1.xpose.msra.mxu0 0.0
        %1198 = vmatprep.subr.mxu0 0.0
        %1199 = vmatpush1.xpose.msra.mxu0 0.0
        %1200 = vmatprep.subr.mxu0 0.0
        %1201 = vmatpush1.xpose.msra.mxu0 0.0
        %1202 = vmatprep.subr.mxu0 0.0
        %1203 = vmatpush1.xpose.msra.mxu0 0.0
        %1204 = vmatprep.subr.mxu0 0.0
        %1205 = vmatpush1.xpose.msra.mxu0 0.0
        %1206 = vmatprep.subr.mxu0 0.0
        %1207 = vmatpush1.xpose.msra.mxu0 0.0
        %1208 = vmatprep.subr.mxu0 0.0
        %1209 = vmatpush1.xpose.msra.mxu0 0.0
        %1210 = vmatprep.subr.mxu0 0.0
        %1211 = vmatpush1.xpose.msra.mxu0 0.0
        %1212 = vmatprep.subr.mxu0 0.0
        %1213 = vmatpush1.xpose.msra.mxu0 0.0
        %1214 = vmatprep.subr.mxu0 0.0
        %1215 = vmatpush1.xpose.msra.mxu0 0.0
        %1216 = vmatprep.subr.mxu0 0.0
        %1217 = vmatpush1.xpose.msra.mxu0 0.0
        %1218 = vmatprep.mubr.f32.mxu0 0.0
        %1219 = vmatmul.mubr.f32.gmra.mrb[0].mxu0 %v1104
        %v1220 = vpop.f32.mrb[0].mxu0
        %v1221 = vadd.f32 0.0, %v1220
        %v1222 = vpop.f32.mrb[0].mxu0
        %1223 = vdwg.mxu0
        %v1224 = vld [vmem:[#allocation2] sm:$0x1]
        %1226 = vset.pattern.permute.xlu0 0
        %1227 = vperm.xlu0 %1226, %v1224
        %v1228 = vpop.permute.xlu0 %1227
        %v1230 = vlaneseq
        %v1231 = vshrl.u32 %v1230, 7
        %v1232 = vsub.s32 0, %v1231
        %v1233 = vrot.slane %v1228, %v1232
        %v1234 = vadd.f32 %v1221, %v1233
        %v1235 = vsub.f32 0.0, %v1234
        %v1236 = vmul.f32 %v1235, 1.442695
        %v1237 = vpow.pop %v1236
        %v1238 = vadd.f32 %v1237, 1.0
        %v1239 = vrcp.pop %v1238
        %v1240 = vmul.f32 1.0, %v1239
        %1241 = vst [vmem:[%s251] sm:$0x1] %v1240
        %s1242 = sand.u32 %s142, 1
        %s1243 = scalar_lea.sflag [#allocation5], %s1242
        %s1244 = sand.u32 %s142, 1
        %s1245 = scalar_lea.vmem [#allocation6], %s1244
        // Predicated region
        $region45: #{finetune_head.1} parent=39 // pred_check
          %p1246 = pneg %p152
        $region46: #{finetune_head.1} parent=39 // pred_check_branch
          %1248 = sbr.rel (%p1246) target = $region48
        $region47: #{finetune_head.1} parent=39 // pred_region
          %s1250 = ssub.s32 16, 16
          %1251 = vsyncadd %s1243, %s1250
          %s1252 = smul.addr %s24, 16
          %s1253 = scalar_lea.hbm %s5, %s1252
          %s1255 = sshll.u32 %s1245, 4
          %s1256 = int_to_ptr.vmem [resolvable:$true] %s1255
          %1258 = dma.vmem_to_hbm [thread:$0]  %s1256, 16, %s1253, %s1243
        $region48: #{finetune_head.1} parent=39 // pred_fallthru
          _
      $region40: #{finetune_head.1} parent=5 // pred_fallthru
        _
      %p1259 = scmp.le.s32.totalorder 2, %s19
      // Predicated region
      $region49: #{finetune_head.1} parent=5 // pred_check
        %p1260 = pneg %p1259
      $region50: #{finetune_head.1} parent=5 // pred_check_branch
        %1262 = sbr.rel (%p1260) target = $region52
      $region51: #{finetune_head.1} parent=5 // pred_region
        %s1263 = ssub.s32 %s19, 2
        // Predicated region
        $region53: #{finetune_head.1} parent=51 // pred_check
          %p1264 = pneg %p158
        $region54: #{finetune_head.1} parent=51 // pred_check_branch
          %1266 = sbr.rel (%p1264) target = $region56
        $region55: #{finetune_head.1} parent=51 // pred_region
          %s1267 = sand.u32 %s143, 1
          %s1268 = scalar_lea.sflag [#allocation5], %s1267
          %s1269 = sand.u32 %s143, 1
          %s1270 = scalar_lea.vmem [#allocation6], %s1269
          %1271 = dma.done %s1268, 16
        $region56: #{finetune_head.1} parent=51 // pred_fallthru
          _
      $region52: #{finetune_head.1} parent=5 // pred_fallthru
        _
    $region6: #{finetune_head.1} parent=1 // loop_footer
      %s23 = sadd.s32 1, %s19
    $region7: #{finetune_head.1} parent=1 // loop_footer_branch
      %18 = sbr.rel target = $region3
    $region8: #{finetune_head.1} parent=1 // loop_exit
      _
    %1272 = vsyncpa [#allocation4], 1
    %s1273 = scalar_lea.sflag [#allocation4], 1
    %1274 = vsyncpa %s1273, 1
    %1275 = vsyncpa [#allocation5], 1
    %s1276 = scalar_lea.sflag [#allocation5], 1
    %1277 = vsyncpa %s1276, 1

</llo_original>
